<compile_context>
chip_gen: v5e
topology: v5e:2x2
jax: 0.10.0
libtpu: 0.0.40
codegen_flags: <defaults>
</compile_context>

<pallas_src>
import functools

import jax
import jax.numpy as jnp
from jax import lax
from jax.experimental import pallas as pl
from jax.experimental.pallas import tpu as pltpu

NUM_CLASSES = 7
BACKGROUND_CLASS = 0
BETA = 0.5
_BISECT_ITERS = 40  # threshold resolution ~ (max_ce + 1) * 2^-40


def _custom_loss_item_kernel(pre_ref, hat_ref, out_ref, *, num_classes,
                             background):
    """Per-batch-item partial losses. Refs are (C+D, N); anchors on lanes."""
    pre = pre_ref[...]                      # (C+D, N) predictions
    hat = hat_ref[...]                      # (C+D, N) targets
    C = num_classes

    c_pre = pre[:C, :]                      # (C, N) predicted class logits
    b_pre = pre[C:, :]                      # (D, N) predicted box offsets
    c_hat = hat[:C, :]                      # (C, N) target class scores
    b_hat = hat[C:, :]                      # (D, N) target box offsets

    N = c_pre.shape[1]
    cls_idx = lax.broadcasted_iota(jnp.int32, (C, N), 0)

    # ---- positive / negative anchor masks (per anchor = per lane) ---------
    hat_max = jnp.max(c_hat, axis=0, keepdims=True)                  # (1, N)
    is_max = c_hat >= hat_max
    hat_argmax = jnp.min(jnp.where(is_max, cls_idx, C), axis=0,
                         keepdims=True)                              # (1, N)
    pos_mask = (hat_max > 0.0) & (hat_argmax != background)          # (1, N)
    pos_f = pos_mask.astype(jnp.float32)
    neg_f = 1.0 - pos_f

    # ---- log-softmax over the class (sublane) axis -------------------------
    z = c_pre - jnp.max(c_pre, axis=0, keepdims=True)
    logp = z - jnp.log(jnp.sum(jnp.exp(z), axis=0, keepdims=True))   # (C, N)

    tgt_onehot = cls_idx == hat_argmax
    ce_pos = -jnp.sum(jnp.where(tgt_onehot, logp, 0.0), axis=0,
                      keepdims=True)                                 # (1, N)
    logp_bg = jnp.sum(jnp.where(cls_idx == background, logp, 0.0), axis=0,
                      keepdims=True)                                 # (1, N)
    ce_bg = -logp_bg                                                 # (1, N) >= 0

    num_pos = jnp.sum(pos_f, axis=1, keepdims=True)                  # (1, 1)
    num_neg_tot = jnp.sum(neg_f, axis=1, keepdims=True)              # (1, 1)
    num_neg = jnp.minimum(3.0 * num_pos, num_neg_tot)                # (1, 1)

    # ---- hard-negative mining: sum of the `num_neg` largest ce_bg among
    #      negatives (== lowest background confidence).  O(N) per step value
    #      bisection instead of the O(N^2) pairwise rank. --------------------
    ce_neg = neg_f * ce_bg                                           # (1, N)
    hi0 = jnp.max(ce_neg, axis=1, keepdims=True)                     # (1, 1)
    lo0 = jnp.full((1, 1), -1.0, jnp.float32)

    def bisect_body(_, carry):
        lo, hi = carry
        mid = 0.5 * (lo + hi)
        cnt = jnp.sum(neg_f * (ce_bg > mid).astype(jnp.float32),
                      axis=1, keepdims=True)
        go_up = cnt >= num_neg            # the k-th largest value is > mid
        return jnp.where(go_up, mid, lo), jnp.where(go_up, hi, mid)

    lo, hi = lax.fori_loop(0, _BISECT_ITERS, bisect_body, (lo0, hi0))

    # Everything strictly above `hi` is inside the top-k; the remaining
    # (num_neg - cnt_hi) selected values all lie in (lo, hi], i.e. within
    # ~2^-40 of `hi`, so approximate them by `hi`.
    sel = neg_f * (ce_bg > hi).astype(jnp.float32)                   # (1, N)
    cnt_hi = jnp.sum(sel, axis=1, keepdims=True)
    sum_hi = jnp.sum(sel * ce_bg, axis=1, keepdims=True)
    resid = jnp.maximum(num_neg - cnt_hi, 0.0) * jnp.maximum(hi, 0.0)
    neg_loss = sum_hi + resid                                        # (1, 1)

    pos_loss = jnp.sum(pos_f * ce_pos, axis=1, keepdims=True)        # (1, 1)

    has_pos = num_pos > 0.0
    has_neg = num_neg_tot > 0.0
    numer = jnp.where(has_neg, pos_loss + neg_loss, pos_loss)
    denom = jnp.where(has_neg, num_neg + num_pos, num_pos)
    item_loss = jnp.where(has_pos,
                          numer / jnp.where(has_pos, denom, 1.0), 0.0)

    # ---- box regression partial: smooth L1 over positive anchors ----------
    diff = b_pre - b_hat
    absd = jnp.abs(diff)
    sl1 = jnp.where(absd < 1.0, 0.5 * diff * diff, absd - 0.5)       # (D, N)
    box_sum = jnp.sum(jnp.sum(sl1 * pos_f, axis=0, keepdims=True),
                      axis=1, keepdims=True)                         # (1, 1)

    # ---- lane-packed per-item partials (aligned (8,128) tile) -------------
    lane = lax.broadcasted_iota(jnp.int32, out_ref.shape, 1)         # (8, 128)
    out_ref[...] = (jnp.where(lane == 0, item_loss, 0.0)
                    + jnp.where(lane == 1, num_pos, 0.0)
                    + jnp.where(lane == 2, box_sum, 0.0))


def custom_loss(y_pre, y_batch, *, num_classes=NUM_CLASSES,
                background=BACKGROUND_CLASS, beta=BETA):
    """Pallas implementation of CustomLoss.forward -> (total, L_class, L_box)."""
    y_pre = y_pre.astype(jnp.float32)
    y_batch = y_batch.astype(jnp.float32)
    B, N, CD = y_pre.shape

    # Channels on sublanes, anchors on the 128-lane axis.
    pre_t = jnp.transpose(y_pre, (0, 2, 1))      # (B, C+D, N)
    hat_t = jnp.transpose(y_batch, (0, 2, 1))    # (B, C+D, N)

    kernel = functools.partial(_custom_loss_item_kernel,
                               num_classes=num_classes,
                               background=background)
    partials = pl.pallas_call(
        kernel,
        out_shape=jax.ShapeDtypeStruct((B, 8, 128), jnp.float32),
        grid=(B,),
        in_specs=[pl.BlockSpec((None, CD, N), lambda b: (b, 0, 0)),
                  pl.BlockSpec((None, CD, N), lambda b: (b, 0, 0))],
        out_specs=pl.BlockSpec((None, 8, 128), lambda b: (b, 0, 0)),
        compiler_params=pltpu.CompilerParams(
            dimension_semantics=("parallel",)),
    )(pre_t, hat_t)

    item_loss = partials[:, 0, 0]                # (B,)
    num_pos = partials[:, 0, 1]                  # (B,)
    box_sum = partials[:, 0, 2]                  # (B,)

    # Tiny cross-batch combine (matches the reference's reductions).
    has_pos = (num_pos > 0.0).astype(jnp.float32)
    n_items = jnp.sum(has_pos)
    l_class = jnp.where(n_items > 0.0,
                        jnp.sum(item_loss) / jnp.maximum(n_items, 1.0), 0.0)
    total_pos = jnp.sum(num_pos)
    l_box = jnp.where(total_pos > 0.0,
                      jnp.sum(box_sum) / (total_pos + 1e-6), 0.0)
    total = l_class + beta * l_box
    return total, l_class, l_box


if __name__ == "__main__":
    key = jax.random.PRNGKey(0)
    k1, k2 = jax.random.split(key)
    B, N, BOX_DIM = 2, 8, 4
    y_pre = jax.random.normal(k1, (B, N, NUM_CLASSES + BOX_DIM),
                              dtype=jnp.float32)
    y_batch = jax.random.normal(k2, (B, N, NUM_CLASSES + BOX_DIM),
                                dtype=jnp.float32)

    total, l_class, l_box = custom_loss(y_pre, y_batch)
    jax.block_until_ready((total, l_class, l_box))
    print("KERNEL_OK")
</pallas_src>

<mosaic_0001>
module attributes {stable_mosaic.version = 11 : i64} {
  func.func @_custom_loss_item_kernel(%arg0: i32, %arg1: memref<1x11x8xf32, #tpu.memory_space<vmem>>, %arg2: memref<1x11x8xf32, #tpu.memory_space<vmem>>, %arg3: memref<1x8x128xf32, #tpu.memory_space<vmem>>) attributes {dimension_semantics = [#tpu.dimension_semantics<parallel>], iteration_bounds = array<i64: 2>, scalar_prefetch = 0 : i64, scratch_operands = 0 : i64, tpu.core_type = #tpu.core_type<tc>, window_params = [{transform_indices = @transform_0, window_bounds = array<i64: 1, 11, 8>}, {transform_indices = @transform_1, window_bounds = array<i64: 1, 11, 8>}, {transform_indices = @transform_2, window_bounds = array<i64: 1, 8, 128>}]} {
    %c0 = arith.constant 0 : index
    %c0_0 = arith.constant 0 : index
    %c0_1 = arith.constant 0 : index
    %0 = vector.load %arg1[%c0, %c0_0, %c0_1] : memref<1x11x8xf32, #tpu.memory_space<vmem>>, vector<1x11x8xf32>
    %1 = vector.shape_cast %0 : vector<1x11x8xf32> to vector<11x8xf32>
    %c0_2 = arith.constant 0 : index
    %c0_3 = arith.constant 0 : index
    %c0_4 = arith.constant 0 : index
    %2 = vector.load %arg2[%c0_2, %c0_3, %c0_4] : memref<1x11x8xf32, #tpu.memory_space<vmem>>, vector<1x11x8xf32>
    %3 = vector.shape_cast %2 : vector<1x11x8xf32> to vector<11x8xf32>
    %4 = vector.extract_strided_slice %1 {offsets = [0, 0], sizes = [7, 8], strides = [1, 1]} : vector<11x8xf32> to vector<7x8xf32>
    %5 = vector.extract_strided_slice %1 {offsets = [7, 0], sizes = [4, 8], strides = [1, 1]} : vector<11x8xf32> to vector<4x8xf32>
    %6 = vector.extract_strided_slice %3 {offsets = [0, 0], sizes = [7, 8], strides = [1, 1]} : vector<11x8xf32> to vector<7x8xf32>
    %7 = vector.extract_strided_slice %3 {offsets = [7, 0], sizes = [4, 8], strides = [1, 1]} : vector<11x8xf32> to vector<4x8xf32>
    %8 = tpu.iota {dimensions = array<i32: 0>} : vector<7x8xi32>
    %cst = arith.constant dense<0xFF800000> : vector<8xf32>
    %9 = vector.multi_reduction <maximumf>, %6, %cst [0] : vector<7x8xf32> to vector<8xf32>
    %10 = vector.shape_cast %9 : vector<8xf32> to vector<1x8xf32>
    %11 = vector.broadcast %10 : vector<1x8xf32> to vector<7x8xf32>
    %12 = arith.cmpf oge, %6, %11 : vector<7x8xf32>
    %c7_i32 = arith.constant 7 : i32
    %13 = vector.broadcast %c7_i32 : i32 to vector<7x8xi32>
    %14 = arith.select %12, %8, %13 : vector<7x8xi1>, vector<7x8xi32>
    %cst_5 = arith.constant dense<2147483647> : vector<8xi32>
    %15 = vector.multi_reduction <minsi>, %14, %cst_5 [0] : vector<7x8xi32> to vector<8xi32>
    %16 = vector.shape_cast %15 : vector<8xi32> to vector<1x8xi32>
    %cst_6 = arith.constant 0.000000e+00 : f32
    %17 = vector.broadcast %cst_6 : f32 to vector<1x8xf32>
    %18 = arith.cmpf ogt, %10, %17 : vector<1x8xf32>
    %c0_i32 = arith.constant 0 : i32
    %19 = vector.broadcast %c0_i32 : i32 to vector<1x8xi32>
    %20 = arith.cmpi ne, %16, %19 : vector<1x8xi32>
    %21 = arith.andi %18, %20 : vector<1x8xi1>
    %22 = arith.extui %21 : vector<1x8xi1> to vector<1x8xi32>
    %23 = arith.sitofp %22 : vector<1x8xi32> to vector<1x8xf32>
    %cst_7 = arith.constant 1.000000e+00 : f32
    %24 = vector.broadcast %cst_7 : f32 to vector<1x8xf32>
    %25 = arith.subf %24, %23 : vector<1x8xf32>
    %cst_8 = arith.constant dense<0xFF800000> : vector<8xf32>
    %26 = vector.multi_reduction <maximumf>, %4, %cst_8 [0] : vector<7x8xf32> to vector<8xf32>
    %27 = vector.shape_cast %26 : vector<8xf32> to vector<1x8xf32>
    %28 = vector.broadcast %27 : vector<1x8xf32> to vector<7x8xf32>
    %29 = arith.subf %4, %28 : vector<7x8xf32>
    %30 = math.exp %29 : vector<7x8xf32>
    %cst_9 = arith.constant dense<0.000000e+00> : vector<8xf32>
    %31 = vector.multi_reduction <add>, %30, %cst_9 [0] : vector<7x8xf32> to vector<8xf32>
    %32 = vector.shape_cast %31 : vector<8xf32> to vector<1x8xf32>
    %33 = math.log %32 : vector<1x8xf32>
    %34 = vector.broadcast %33 : vector<1x8xf32> to vector<7x8xf32>
    %35 = arith.subf %29, %34 : vector<7x8xf32>
    %36 = vector.broadcast %16 : vector<1x8xi32> to vector<7x8xi32>
    %37 = arith.cmpi eq, %8, %36 : vector<7x8xi32>
    %cst_10 = arith.constant 0.000000e+00 : f32
    %38 = vector.broadcast %cst_10 : f32 to vector<7x8xf32>
    %39 = arith.select %37, %35, %38 : vector<7x8xi1>, vector<7x8xf32>
    %cst_11 = arith.constant dense<0.000000e+00> : vector<8xf32>
    %40 = vector.multi_reduction <add>, %39, %cst_11 [0] : vector<7x8xf32> to vector<8xf32>
    %41 = vector.shape_cast %40 : vector<8xf32> to vector<1x8xf32>
    %cst_12 = arith.constant 0.000000e+00 : f32
    %42 = vector.broadcast %cst_12 : f32 to vector<1x8xf32>
    %43 = arith.subf %42, %41 : vector<1x8xf32>
    %c0_i32_13 = arith.constant 0 : i32
    %44 = vector.broadcast %c0_i32_13 : i32 to vector<7x8xi32>
    %45 = arith.cmpi eq, %8, %44 : vector<7x8xi32>
    %cst_14 = arith.constant 0.000000e+00 : f32
    %46 = vector.broadcast %cst_14 : f32 to vector<7x8xf32>
    %47 = arith.select %45, %35, %46 : vector<7x8xi1>, vector<7x8xf32>
    %cst_15 = arith.constant dense<0.000000e+00> : vector<8xf32>
    %48 = vector.multi_reduction <add>, %47, %cst_15 [0] : vector<7x8xf32> to vector<8xf32>
    %49 = vector.shape_cast %48 : vector<8xf32> to vector<1x8xf32>
    %cst_16 = arith.constant 0.000000e+00 : f32
    %50 = vector.broadcast %cst_16 : f32 to vector<1x8xf32>
    %51 = arith.subf %50, %49 : vector<1x8xf32>
    %cst_17 = arith.constant dense<0.000000e+00> : vector<1xf32>
    %52 = vector.multi_reduction <add>, %23, %cst_17 [1] : vector<1x8xf32> to vector<1xf32>
    %53 = vector.shape_cast %52 : vector<1xf32> to vector<1x1xf32>
    %cst_18 = arith.constant dense<0.000000e+00> : vector<1xf32>
    %54 = vector.multi_reduction <add>, %25, %cst_18 [1] : vector<1x8xf32> to vector<1xf32>
    %55 = vector.shape_cast %54 : vector<1xf32> to vector<1x1xf32>
    %cst_19 = arith.constant 3.000000e+00 : f32
    %56 = vector.broadcast %cst_19 : f32 to vector<1x1xf32>
    %57 = arith.mulf %56, %53 : vector<1x1xf32>
    %58 = arith.minimumf %57, %55 : vector<1x1xf32>
    %59 = arith.mulf %25, %51 : vector<1x8xf32>
    %cst_20 = arith.constant dense<0xFF800000> : vector<1xf32>
    %60 = vector.multi_reduction <maximumf>, %59, %cst_20 [1] : vector<1x8xf32> to vector<1xf32>
    %61 = vector.shape_cast %60 : vector<1xf32> to vector<1x1xf32>
    %cst_21 = arith.constant -1.000000e+00 : f32
    %62 = vector.broadcast %cst_21 : f32 to vector<1x1xf32>
    %c0_i32_22 = arith.constant 0 : i32
    %c40_i32 = arith.constant 40 : i32
    %63 = arith.addi %c0_i32_22, %c40_i32 : i32
    %c1_i32 = arith.constant 1 : i32
    %64:2 = scf.for %arg4 = %c0_i32_22 to %63 step %c1_i32 iter_args(%arg5 = %62, %arg6 = %61) -> (vector<1x1xf32>, vector<1x1xf32>)  : i32 {
      %138 = arith.addf %arg5, %arg6 : vector<1x1xf32>
      %cst_45 = arith.constant 5.000000e-01 : f32
      %139 = vector.broadcast %cst_45 : f32 to vector<1x1xf32>
      %140 = arith.mulf %139, %138 : vector<1x1xf32>
      %141 = vector.broadcast %140 : vector<1x1xf32> to vector<1x8xf32>
      %142 = arith.cmpf ogt, %51, %141 : vector<1x8xf32>
      %143 = arith.extui %142 : vector<1x8xi1> to vector<1x8xi32>
      %144 = arith.sitofp %143 : vector<1x8xi32> to vector<1x8xf32>
      %145 = arith.mulf %25, %144 : vector<1x8xf32>
      %cst_46 = arith.constant dense<0.000000e+00> : vector<1xf32>
      %146 = vector.multi_reduction <add>, %145, %cst_46 [1] : vector<1x8xf32> to vector<1xf32>
      %147 = vector.shape_cast %146 : vector<1xf32> to vector<1x1xf32>
      %148 = arith.cmpf oge, %147, %58 : vector<1x1xf32>
      %149 = arith.select %148, %140, %arg5 : vector<1x1xi1>, vector<1x1xf32>
      %150 = arith.select %148, %arg6, %140 : vector<1x1xi1>, vector<1x1xf32>
      scf.yield %149, %150 : vector<1x1xf32>, vector<1x1xf32>
    }
    %65 = vector.broadcast %64#1 : vector<1x1xf32> to vector<1x8xf32>
    %66 = arith.cmpf ogt, %51, %65 : vector<1x8xf32>
    %67 = arith.extui %66 : vector<1x8xi1> to vector<1x8xi32>
    %68 = arith.sitofp %67 : vector<1x8xi32> to vector<1x8xf32>
    %69 = arith.mulf %25, %68 : vector<1x8xf32>
    %cst_23 = arith.constant dense<0.000000e+00> : vector<1xf32>
    %70 = vector.multi_reduction <add>, %69, %cst_23 [1] : vector<1x8xf32> to vector<1xf32>
    %71 = vector.shape_cast %70 : vector<1xf32> to vector<1x1xf32>
    %72 = arith.mulf %69, %51 : vector<1x8xf32>
    %cst_24 = arith.constant dense<0.000000e+00> : vector<1xf32>
    %73 = vector.multi_reduction <add>, %72, %cst_24 [1] : vector<1x8xf32> to vector<1xf32>
    %74 = vector.shape_cast %73 : vector<1xf32> to vector<1x1xf32>
    %75 = arith.subf %58, %71 : vector<1x1xf32>
    %cst_25 = arith.constant 0.000000e+00 : f32
    %76 = vector.broadcast %cst_25 : f32 to vector<1x1xf32>
    %77 = arith.maximumf %75, %76 : vector<1x1xf32>
    %cst_26 = arith.constant 0.000000e+00 : f32
    %78 = vector.broadcast %cst_26 : f32 to vector<1x1xf32>
    %79 = arith.maximumf %64#1, %78 : vector<1x1xf32>
    %80 = arith.mulf %77, %79 : vector<1x1xf32>
    %81 = arith.addf %74, %80 : vector<1x1xf32>
    %82 = arith.mulf %23, %43 : vector<1x8xf32>
    %cst_27 = arith.constant dense<0.000000e+00> : vector<1xf32>
    %83 = vector.multi_reduction <add>, %82, %cst_27 [1] : vector<1x8xf32> to vector<1xf32>
    %84 = vector.shape_cast %83 : vector<1xf32> to vector<1x1xf32>
    %cst_28 = arith.constant 0.000000e+00 : f32
    %85 = vector.broadcast %cst_28 : f32 to vector<1x1xf32>
    %86 = arith.cmpf ogt, %53, %85 : vector<1x1xf32>
    %cst_29 = arith.constant 0.000000e+00 : f32
    %87 = vector.broadcast %cst_29 : f32 to vector<1x1xf32>
    %88 = arith.cmpf ogt, %55, %87 : vector<1x1xf32>
    %89 = arith.addf %84, %81 : vector<1x1xf32>
    %90 = arith.select %88, %89, %84 : vector<1x1xi1>, vector<1x1xf32>
    %91 = arith.addf %58, %53 : vector<1x1xf32>
    %92 = arith.select %88, %91, %53 : vector<1x1xi1>, vector<1x1xf32>
    %cst_30 = arith.constant 1.000000e+00 : f32
    %93 = vector.broadcast %cst_30 : f32 to vector<1x1xf32>
    %94 = arith.select %86, %92, %93 : vector<1x1xi1>, vector<1x1xf32>
    %95 = arith.divf %90, %94 : vector<1x1xf32>
    %cst_31 = arith.constant 0.000000e+00 : f32
    %96 = vector.broadcast %cst_31 : f32 to vector<1x1xf32>
    %97 = arith.select %86, %95, %96 : vector<1x1xi1>, vector<1x1xf32>
    %98 = arith.subf %5, %7 : vector<4x8xf32>
    %99 = math.absf %98 : vector<4x8xf32>
    %cst_32 = arith.constant 1.000000e+00 : f32
    %100 = vector.broadcast %cst_32 : f32 to vector<4x8xf32>
    %101 = arith.cmpf olt, %99, %100 : vector<4x8xf32>
    %cst_33 = arith.constant 5.000000e-01 : f32
    %102 = vector.broadcast %cst_33 : f32 to vector<4x8xf32>
    %103 = arith.mulf %102, %98 : vector<4x8xf32>
    %104 = arith.mulf %103, %98 : vector<4x8xf32>
    %cst_34 = arith.constant 5.000000e-01 : f32
    %105 = vector.broadcast %cst_34 : f32 to vector<4x8xf32>
    %106 = arith.subf %99, %105 : vector<4x8xf32>
    %107 = arith.select %101, %104, %106 : vector<4x8xi1>, vector<4x8xf32>
    %108 = vector.broadcast %23 : vector<1x8xf32> to vector<4x8xf32>
    %109 = arith.mulf %107, %108 : vector<4x8xf32>
    %cst_35 = arith.constant dense<0.000000e+00> : vector<8xf32>
    %110 = vector.multi_reduction <add>, %109, %cst_35 [0] : vector<4x8xf32> to vector<8xf32>
    %111 = vector.shape_cast %110 : vector<8xf32> to vector<1x8xf32>
    %cst_36 = arith.constant dense<0.000000e+00> : vector<1xf32>
    %112 = vector.multi_reduction <add>, %111, %cst_36 [1] : vector<1x8xf32> to vector<1xf32>
    %113 = vector.shape_cast %112 : vector<1xf32> to vector<1x1xf32>
    %114 = tpu.iota {dimensions = array<i32: 1>} : vector<8x128xi32>
    %c0_i32_37 = arith.constant 0 : i32
    %115 = vector.broadcast %c0_i32_37 : i32 to vector<8x128xi32>
    %116 = arith.cmpi eq, %114, %115 : vector<8x128xi32>
    %cst_38 = arith.constant 0.000000e+00 : f32
    %117 = vector.shape_cast %97 : vector<1x1xf32> to vector<1x1xf32>
    %118 = vector.broadcast %117 : vector<1x1xf32> to vector<8x128xf32>
    %119 = vector.broadcast %cst_38 : f32 to vector<8x128xf32>
    %120 = arith.select %116, %118, %119 : vector<8x128xi1>, vector<8x128xf32>
    %c1_i32_39 = arith.constant 1 : i32
    %121 = vector.broadcast %c1_i32_39 : i32 to vector<8x128xi32>
    %122 = arith.cmpi eq, %114, %121 : vector<8x128xi32>
    %cst_40 = arith.constant 0.000000e+00 : f32
    %123 = vector.shape_cast %53 : vector<1x1xf32> to vector<1x1xf32>
    %124 = vector.broadcast %123 : vector<1x1xf32> to vector<8x128xf32>
    %125 = vector.broadcast %cst_40 : f32 to vector<8x128xf32>
    %126 = arith.select %122, %124, %125 : vector<8x128xi1>, vector<8x128xf32>
    %127 = arith.addf %120, %126 : vector<8x128xf32>
    %c2_i32 = arith.constant 2 : i32
    %128 = vector.broadcast %c2_i32 : i32 to vector<8x128xi32>
    %129 = arith.cmpi eq, %114, %128 : vector<8x128xi32>
    %cst_41 = arith.constant 0.000000e+00 : f32
    %130 = vector.shape_cast %113 : vector<1x1xf32> to vector<1x1xf32>
    %131 = vector.broadcast %130 : vector<1x1xf32> to vector<8x128xf32>
    %132 = vector.broadcast %cst_41 : f32 to vector<8x128xf32>
    %133 = arith.select %129, %131, %132 : vector<8x128xi1>, vector<8x128xf32>
    %134 = arith.addf %127, %133 : vector<8x128xf32>
    %c0_42 = arith.constant 0 : index
    %c0_43 = arith.constant 0 : index
    %c0_44 = arith.constant 0 : index
    %135 = vector.load %arg3[%c0_42, %c0_43, %c0_44] : memref<1x8x128xf32, #tpu.memory_space<vmem>>, vector<1x8x128xf32>
    %136 = vector.shape_cast %135 : vector<1x8x128xf32> to vector<8x128xf32>
    %137 = vector.shape_cast %134 : vector<8x128xf32> to vector<1x8x128xf32>
    tpu.vector_store %arg3[%c0_42, %c0_43, %c0_44], %137 {strides = array<i32>} : memref<1x8x128xf32, #tpu.memory_space<vmem>>, vector<1x8x128xf32>,
    return
  }
  func.func @transform_0(%arg0: i32) -> (i32, i32, i32) {
    %c0_i32 = arith.constant 0 : i32
    %c0_i32_0 = arith.constant 0 : i32
    %c0_i32_1 = arith.constant 0 : i32
    return %arg0, %c0_i32, %c0_i32_0 : i32, i32, i32
  }
  func.func @transform_1(%arg0: i32) -> (i32, i32, i32) {
    %c0_i32 = arith.constant 0 : i32
    %c0_i32_0 = arith.constant 0 : i32
    %c0_i32_1 = arith.constant 0 : i32
    return %arg0, %c0_i32, %c0_i32_0 : i32, i32, i32
  }
  func.func @transform_2(%arg0: i32) -> (i32, i32, i32) {
    %c0_i32 = arith.constant 0 : i32
    %c0_i32_0 = arith.constant 0 : i32
    %c0_i32_1 = arith.constant 0 : i32
    return %arg0, %c0_i32, %c0_i32_0 : i32, i32, i32
  }
}

</mosaic_0001>

<llo_original>
// kernel: tpu_custom_call.1
$region0: #{tpu_custom_call.1}
  #allocation0 [shape = 'u32[]', space=smem, size = 0x4, offset = 0x4, fixed_abs, tag = 'smem constant byte address 0x4 - core index']
  #allocation1 [shape = 'u32[72,128]{1,0:T(1,128)}', space=vmem, size = 0x9000, scoped, tag = 'internal scratch']
  %s0 = inlined_call_operand.vmem [shape: f32[2,11,8], index: 0, kind: input, shape index: {}]
  %s1 = inlined_call_operand.vmem [shape: f32[2,11,8], index: 1, kind: input, shape index: {}]
  %s2 = inlined_call_operand.hbm [shape: f32[2,8,128], index: 2, kind: output, shape index: {}]
  %s3 = sld [smem:[#allocation0]]
  $region48: #{tpu_custom_call.1} parent=0
    _
  %s5 = ssub.s32 1, %s3
  %s6 = scalar_select 0, %s5, %s3
  $region1: #{tpu_custom_call.1} parent=0
    #allocation2 [shape = 'u8[8192]{0}', space=vmem, size = 0x2000, scoped, tag = 'output window, operand 0']
    #allocation3 [shape = 's32[2]{0}', space=sflag, size = 0x8, scoped, tag = 'scoped memory for tpu_custom_call.1']
    %7 = vsyncpa [#allocation3], 0
    %s8 = scalar_lea.sflag [#allocation3], 1
    %9 = vsyncpa %s8, 0
    loop: start=0, step=1, limit=4
    $region2: #{tpu_custom_call.1} parent=1 // loop_pre_header
      _
    $region3: #{tpu_custom_call.1} parent=1 // loop_header
      %s11 = sphi 0, %s15
      %p12 = scmp.ge.s32.totalorder %s11, 4
      %s21 = sphi 0, %s23
      %s24 = sphi 0, %s21
      %s25 = sphi 0, %s24
      %s41 = sphi 0, %s25
      %s47 = sphi 0, %s49
      %s50 = sphi 0, %s47
      %s51 = sphi 0, %s50
      %s67 = sphi 0, %s51
      %s73 = sphi 0, %s75
      %s76 = sphi 0, %s73
      %s77 = sphi 0, %s76
      %s93 = sphi 0, %s77
    $region4: #{tpu_custom_call.1} parent=1 // loop_header_branch
      %14 = sbr.rel (%p12) target = $region8
    $region5: #{tpu_custom_call.1} parent=1 // loop_body
      %s16 = ssub.s32 %s11, 1
      %s17 = ssub.s32 %s11, 2
      %s18 = sadd.s32 %s11, 1
      %s19 = ssub.s32 %s11, %s18
      %p20 = scmp.eq.s32.totalorder %s19, 0
      %s22 = sadd.s32 %s21, 1
      %s23 = scalar_select %p20, %s21, %s22
      %p26 = pneg %p20
      %p27 = scmp.eq.s32.totalorder %s11, 1
      %p28 = por %p26, %p27
      %p29 = scmp.ne.s32.totalorder %s21, %s24
      %p30 = scmp.eq.s32.totalorder %s11, 0
      %p31 = por %p29, %p30
      %p32 = scmp.ne.s32.totalorder %s21, %s24
      %p33 = scmp.eq.s32.totalorder %s16, 1
      %p34 = por %p32, %p33
      %p35 = scmp.ne.s32.totalorder %s24, %s25
      %p36 = scmp.eq.s32.totalorder %s16, 0
      %p37 = por %p35, %p36
      %p38 = scmp.ne.s32.totalorder %s24, %s25
      %p39 = scmp.eq.s32.totalorder %s17, 1
      %p40 = por %p38, %p39
      %p42 = scmp.ne.s32.totalorder %s25, %s41
      %p43 = scmp.eq.s32.totalorder %s17, 0
      %p44 = por %p42, %p43
      %s45 = ssub.s32 %s11, %s18
      %p46 = scmp.eq.s32.totalorder %s45, 0
      %s48 = sadd.s32 %s47, 1
      %s49 = scalar_select %p46, %s47, %s48
      %p52 = pneg %p46
      %p53 = scmp.eq.s32.totalorder %s11, 1
      %p54 = por %p52, %p53
      %p55 = scmp.ne.s32.totalorder %s47, %s50
      %p56 = scmp.eq.s32.totalorder %s11, 0
      %p57 = por %p55, %p56
      %p58 = scmp.ne.s32.totalorder %s47, %s50
      %p59 = scmp.eq.s32.totalorder %s16, 1
      %p60 = por %p58, %p59
      %p61 = scmp.ne.s32.totalorder %s50, %s51
      %p62 = scmp.eq.s32.totalorder %s16, 0
      %p63 = por %p61, %p62
      %p64 = scmp.ne.s32.totalorder %s50, %s51
      %p65 = scmp.eq.s32.totalorder %s17, 1
      %p66 = por %p64, %p65
      %p68 = scmp.ne.s32.totalorder %s51, %s67
      %p69 = scmp.eq.s32.totalorder %s17, 0
      %p70 = por %p68, %p69
      %s71 = ssub.s32 %s11, %s18
      %p72 = scmp.eq.s32.totalorder %s71, 0
      %s74 = sadd.s32 %s73, 1
      %s75 = scalar_select %p72, %s73, %s74
      %p78 = pneg %p72
      %p79 = scmp.eq.s32.totalorder %s11, 1
      %p80 = por %p78, %p79
      %p81 = scmp.ne.s32.totalorder %s73, %s76
      %p82 = scmp.eq.s32.totalorder %s11, 0
      %p83 = por %p81, %p82
      %p84 = scmp.ne.s32.totalorder %s73, %s76
      %p85 = scmp.eq.s32.totalorder %s16, 1
      %p86 = por %p84, %p85
      %p87 = scmp.ne.s32.totalorder %s76, %s77
      %p88 = scmp.eq.s32.totalorder %s16, 0
      %p89 = por %p87, %p88
      %p90 = scmp.ne.s32.totalorder %s76, %s77
      %p91 = scmp.eq.s32.totalorder %s17, 1
      %p92 = por %p90, %p91
      %p94 = scmp.ne.s32.totalorder %s77, %s93
      %p95 = scmp.eq.s32.totalorder %s17, 0
      %p96 = por %p94, %p95
      %p97 = scmp.le.s32.totalorder 1, %s11
      %p98 = scmp.lt.s32.totalorder %s11, 3
      %p99 = pnand %p97, %p98
      %p100 = pneg %p99
      // Predicated region
      $region9: #{tpu_custom_call.1} parent=5 // pred_check
        _
      $region10: #{tpu_custom_call.1} parent=5 // pred_check_branch
        %102 = sbr.rel (%p99) target = $region12
      $region11: #{tpu_custom_call.1} parent=5 // pred_region
        %s103 = ssub.s32 %s11, 1
      $region12: #{tpu_custom_call.1} parent=5 // pred_fallthru
        _
      %p104 = scmp.lt.s32.totalorder %s11, 2
      // Predicated region
      $region13: #{tpu_custom_call.1} parent=5 // pred_check
        %p105 = pneg %p104
      $region14: #{tpu_custom_call.1} parent=5 // pred_check_branch
        %107 = sbr.rel (%p105) target = $region16
      $region15: #{tpu_custom_call.1} parent=5 // pred_region
        // Predicated region
        $region17: #{tpu_custom_call.1} parent=15 // pred_check
          %p108 = pneg %p31
        $region18: #{tpu_custom_call.1} parent=15 // pred_check_branch
          %110 = sbr.rel (%p108) target = $region20
        $region19: #{tpu_custom_call.1} parent=15 // pred_region
          %p111 = scmp.lt.s32.totalorder %s11, 1
          %s112 = scalar_select %p111, %s11, 1
          %s113 = smul.addr %s112, 2
          %s114 = smul.addr %s113, 8
          %s115 = scalar_lea.vmem %s0, %s114
        $region20: #{tpu_custom_call.1} parent=15 // pred_fallthru
          _
        // Predicated region
        $region21: #{tpu_custom_call.1} parent=15 // pred_check
          %p116 = pneg %p57
        $region22: #{tpu_custom_call.1} parent=15 // pred_check_branch
          %118 = sbr.rel (%p116) target = $region24
        $region23: #{tpu_custom_call.1} parent=15 // pred_region
          %p119 = scmp.lt.s32.totalorder %s11, 1
          %s120 = scalar_select %p119, %s11, 1
          %s121 = smul.addr %s120, 2
          %s122 = smul.addr %s121, 8
          %s123 = scalar_lea.vmem %s1, %s122
        $region24: #{tpu_custom_call.1} parent=15 // pred_fallthru
          _
      $region16: #{tpu_custom_call.1} parent=5 // pred_fallthru
        _
      %p124 = scmp.le.s32.totalorder 1, %s11
      %p125 = scmp.lt.s32.totalorder %s11, 3
      %p126 = pnand %p124, %p125
      %p127 = pneg %p126
      // Predicated region
      $region25: #{tpu_custom_call.1} parent=5 // pred_check
        _
      $region26: #{tpu_custom_call.1} parent=5 // pred_check_branch
        %129 = sbr.rel (%p126) target = $region28
      $region27: #{tpu_custom_call.1} parent=5 // pred_region
        %s130 = ssub.s32 %s11, 1
        %p131 = scmp.lt.s32.totalorder %s16, 1
        %s132 = scalar_select %p131, %s16, 1
        %s133 = smul.addr %s132, 2
        %s134 = smul.addr %s133, 8
        %s135 = scalar_lea.vmem %s0, %s134
        %p136 = pneg %p37
        %p137 = pneg %p34
        %p138 = scmp.lt.s32.totalorder %s16, 1
        %s139 = scalar_select %p138, %s16, 1
        %s140 = smul.addr %s139, 2
        %s141 = smul.addr %s140, 8
        %s142 = scalar_lea.vmem %s1, %s141
        %p143 = pneg %p63
        %p144 = pneg %p60
        %p145 = pneg %p89
        %p146 = pneg %p86
        %s147 = sand.u32 %s76, 1
        %s148 = scalar_lea.sflag [#allocation3], %s147
        %s149 = sand.u32 %s76, 1
        %s150 = smul.addr %s149, 8
        %s151 = scalar_lea.vmem [#allocation2], %s150
        %p152 = scmp.lt.s32.totalorder %s16, 1
        %s153 = scalar_select %p152, %s16, 1
        %s154 = smul.addr %s153, 2
        %s155 = smul.addr %s154, 8
        %s156 = scalar_lea.vmem %s0, %s155
        %p157 = scmp.lt.s32.totalorder %s16, 1
        %s158 = scalar_select %p157, %s16, 1
        %s159 = smul.addr %s158, 2
        %s160 = smul.addr %s159, 8
        %s161 = scalar_lea.vmem %s1, %s160
        %v162 = vld [vmem:[%s156] sm:$0xff]
        %v163 = vld [vmem:[%s156 + $0x8] sm:$0x7]
        %v164 = vld [vmem:[%s161] sm:$0xff]
        %v165 = vld [vmem:[%s161 + $0x8] sm:$0x7]
        %v166 = vlaneseq
        %v167 = vshrl.u32 %v166, 7
        %vm168 = vcmask 63488
        %v169 = vsel %vm168, %v164, -inf
        %v170 = vrot.slane %v169, 4
        %v171 = vmax.f32 %v169, %v170
        %v172 = vrot.slane %v171, 2
        %v173 = vmax.f32 %v171, %v172
        %v174 = vrot.slane %v173, 1
        %v175 = vmax.f32 %v173, %v174
        %vm176 = vcmp.ge.f32.partialorder %v164, %v175
        %v177 = vsel %vm176, %v167, 7
        %v178 = vsel %vm168, %v177, 2147483647
        %v179 = vrot.slane %v178, 4
        %vm180 = vcmp.lt.s32.totalorder %v178, %v179
        %v181 = vsel %vm180, %v178, %v179
        %v182 = vrot.slane %v181, 2
        %vm183 = vcmp.lt.s32.totalorder %v181, %v182
        %v184 = vsel %vm183, %v181, %v182
        %v185 = vrot.slane %v184, 1
        %vm186 = vcmp.lt.s32.totalorder %v184, %v185
        %v187 = vsel %vm186, %v184, %v185
        %vm188 = vcmp.gt.f32.partialorder %v175, 0.0
        %vm189 = vcmp.ne.s32.totalorder %v187, 0
        %vm190 = vmand %vm188, %vm189
        %v191 = vsel %vm190, 1, 0
        %v192 = vcvt.s32.f32 %v191
        %v193 = vsub.f32 1.0, %v192
        %v194 = vsel %vm168, %v162, -inf
        %v195 = vrot.slane %v194, 4
        %v196 = vmax.f32 %v194, %v195
        %v197 = vrot.slane %v196, 2
        %v198 = vmax.f32 %v196, %v197
        %v199 = vrot.slane %v198, 1
        %v200 = vmax.f32 %v198, %v199
        %v201 = vsub.f32 %v162, %v200
        %v202 = vmul.f32 %v201, 1.442695
        %v203 = vpow.pop %v202
        %v204 = vsel %vm168, %v203, 0.0
        %v205 = vrot.slane %v204, 4
        %v206 = vadd.f32 %v204, %v205
        %v207 = vrot.slane %v206, 2
        %v208 = vadd.f32 %v206, %v207
        %v209 = vrot.slane %v208, 1
        %v210 = vadd.f32 %v208, %v209
        %v211 = vlog2.pop %v210
        %v212 = vmul.f32 %v211, 0.6931472
        %v213 = vsub.f32 %v201, %v212
        %vm214 = vcmp.eq.s32.totalorder %v167, %v187
        %v215 = vsel %vm214, %v213, 0.0
        %v216 = vsel %vm168, %v215, 0.0
        %v217 = vrot.slane %v216, 4
        %v218 = vadd.f32 %v216, %v217
        %v219 = vrot.slane %v218, 2
        %v220 = vadd.f32 %v218, %v219
        %v221 = vrot.slane %v220, 1
        %v222 = vadd.f32 %v220, %v221
        %v223 = vsub.f32 0.0, %v222
        %vm224 = vcmp.eq.s32.totalorder %v167, 0
        %v225 = vsel %vm224, %v213, 0.0
        %v226 = vsel %vm168, %v225, 0.0
        %v227 = vrot.slane %v226, 4
        %v228 = vadd.f32 %v226, %v227
        %v229 = vrot.slane %v228, 2
        %v230 = vadd.f32 %v228, %v229
        %v231 = vrot.slane %v230, 1
        %v232 = vadd.f32 %v230, %v231
        %v233 = vsub.f32 0.0, %v232
        %vm234 = vcmask 64512
        %v235 = vsel %vm234, %v192, 0.0
        %236 = vadd.xlane.f32.xlu0 %v235
        %v237 = vpop.xlane.xlu0 %236
        %v238 = vsel %vm234, %v193, 0.0
        %239 = vadd.xlane.f32.xlu0 %v238
        %v240 = vpop.xlane.xlu0 %239
        %v241 = vmul.f32 %v237, 3.0
        %v242 = vmin.f32 %v241, %v240
        %v243 = vmul.f32 %v193, %v233
        %v244 = vsel %vm234, %v243, -inf
        %245 = vmax.xlane.f32.xlu0 %v244
        %v246 = vpop.xlane.xlu0 %245
        loop: start=0, step=1, limit=40
        $region29: #{tpu_custom_call.1} parent=27 // loop_pre_header
          _
        $region30: #{tpu_custom_call.1} parent=27 // loop_header
          %s248 = sphi 0, %s252
          %p249 = scmp.ge.s32.totalorder %s248, 40
          %v253 = vphi -1.0, %v265
          %v254 = vphi %v246, %v266
        $region31: #{tpu_custom_call.1} parent=27 // loop_header_branch
          %251 = sbr.rel (%p249) target = $region35
        $region32: #{tpu_custom_call.1} parent=27 // loop_body
          %v255 = vadd.f32 %v253, %v254
          %v256 = vmul.f32 %v255, 0.5
          %vm257 = vcmp.gt.f32.partialorder %v233, %v256
          %v258 = vsel %vm257, 1, 0
          %v259 = vcvt.s32.f32 %v258
          %v260 = vmul.f32 %v193, %v259
          %v261 = vsel %vm234, %v260, 0.0
          %262 = vadd.xlane.f32.xlu0 %v261
          %v263 = vpop.xlane.xlu0 %262
          %vm264 = vcmp.ge.f32.partialorder %v263, %v242
          %v265 = vsel %vm264, %v256, %v253
          %v266 = vsel %vm264, %v254, %v256
        $region33: #{tpu_custom_call.1} parent=27 // loop_footer
          %s252 = sadd.s32 1, %s248
        $region34: #{tpu_custom_call.1} parent=27 // loop_footer_branch
          %247 = sbr.rel target = $region30
        $region35: #{tpu_custom_call.1} parent=27 // loop_exit
          _
        %vm267 = vcmp.gt.f32.partialorder %v233, %v254
        %v268 = vsel %vm267, 1, 0
        %v269 = vcvt.s32.f32 %v268
        %v270 = vmul.f32 %v193, %v269
        %v271 = vsel %vm234, %v270, 0.0
        %272 = vadd.xlane.f32.xlu0 %v271
        %v273 = vpop.xlane.xlu0 %272
        %v274 = vmul.f32 %v270, %v233
        %v275 = vsel %vm234, %v274, 0.0
        %276 = vadd.xlane.f32.xlu0 %v275
        %v277 = vpop.xlane.xlu0 %276
        %v278 = vsub.f32 %v242, %v273
        %v279 = vmax.f32 %v278, 0.0
        %v280 = vmax.f32 %v254, 0.0
        %v281 = vmul.f32 %v279, %v280
        %v282 = vadd.f32 %v277, %v281
        %v283 = vmul.f32 %v192, %v223
        %v284 = vsel %vm234, %v283, 0.0
        %285 = vadd.xlane.f32.xlu0 %v284
        %v286 = vpop.xlane.xlu0 %285
        %vm287 = vcmp.gt.f32.partialorder %v237, 0.0
        %vm288 = vcmp.gt.f32.partialorder %v240, 0.0
        %v289 = vadd.f32 %v286, %v282
        %v290 = vsel %vm288, %v289, %v286
        %v291 = vadd.f32 %v242, %v237
        %v292 = vsel %vm288, %v291, %v237
        %v293 = vsel %vm287, %v292, 1.0
        %v294 = vrcp.pop %v293
        %v295 = vmul.f32 %v293, %v294
        %v296 = vsub.f32 1.0, %v295
        %v297 = vmul.f32 %v294, %v296
        %v298 = vadd.f32 %v294, %v297
        %vm299 = vweird.f32 %v293
        %vm300 = vweird.f32 %v294
        %vm301 = vmor %vm299, %vm300
        %v302 = vsel %vm301, %v294, %v298
        %v303 = vand.u32 2147483647, %v293
        %vm304 = vcmp.eq.f32.partialorder %v303, 8.507059e+37
        %v305 = vand.u32 %v293, 2147483648
        %v306 = vor.u32 1.1754944e-38, %v305
        %v307 = vsel %vm304, %v306, %v302
        %v308 = vmul.f32 %v290, %v307
        %v309 = vsel %vm287, %v308, 0.0
        %v310 = vsub.f32 %v162, %v164
        %v311 = vsub.f32 %v163, %v165
        %v312 = vand.u32 2147483647, %v310
        %v313 = vand.u32 2147483647, %v311
        %vm314 = vcmp.lt.f32.partialorder %v312, 1.0
        %vm315 = vcmp.lt.f32.partialorder %v313, 1.0
        %v316 = vmul.f32 %v310, 0.5
        %v317 = vmul.f32 %v311, 0.5
        %v318 = vmul.f32 %v316, %v310
        %v319 = vmul.f32 %v317, %v311
        %v320 = vsub.f32 %v312, 0.5
        %v321 = vsub.f32 %v313, 0.5
        %v322 = vsel %vm314, %v318, %v320
        %v323 = vsel %vm315, %v319, %v321
        %v324 = vmul.f32 %v322, %v192
        %v325 = vmul.f32 %v323, %v192
        %vm328 = vcmask 1040384
        %v329 = vrot.slane %v324, 7
        %v330 = vrot.slane %v325, 7
        %v331 = vsel %vm328, %v329, %v330
        %vm333 = vcmask 60416
        %v334 = vsel %vm333, %v331, 0.0
        %v335 = vrot.slane %v334, 4
        %v336 = vadd.f32 %v334, %v335
        %v337 = vrot.slane %v336, 2
        %v338 = vadd.f32 %v336, %v337
        %v339 = vrot.slane %v338, 1
        %v340 = vadd.f32 %v338, %v339
        %v341 = vsel %vm234, %v340, 0.0
        %342 = vadd.xlane.f32.xlu0 %v341
        %v343 = vpop.xlane.xlu0 %342
        %v344 = vlaneseq
        %v345 = vand.u32 %v344, 127
        %vm346 = vcmp.eq.s32.totalorder %v345, 0
        %v347 = vsel %vm346, %v309, 0.0
        %vm348 = vcmp.eq.s32.totalorder %v345, 1
        %v349 = vsel %vm348, %v237, 0.0
        %v350 = vadd.f32 %v347, %v349
        %vm351 = vcmp.eq.s32.totalorder %v345, 2
        %v352 = vsel %vm351, %v343, 0.0
        %v353 = vadd.f32 %v350, %v352
        %354 = vst [vmem:[%s151] sm:$0xff] %v353
        %s355 = sand.u32 %s76, 1
        %s356 = scalar_lea.sflag [#allocation3], %s355
        %s357 = sand.u32 %s76, 1
        %s358 = smul.addr %s357, 8
        %s359 = scalar_lea.vmem [#allocation2], %s358
        // Predicated region
        $region36: #{tpu_custom_call.1} parent=27 // pred_check
          %p360 = pneg %p86
        $region37: #{tpu_custom_call.1} parent=27 // pred_check_branch
          %362 = sbr.rel (%p360) target = $region39
        $region38: #{tpu_custom_call.1} parent=27 // pred_region
          %364 = vsyncadd %s356, 0
          %s365 = smul.addr %s16, 8
          %s366 = scalar_lea.hbm %s2, %s365
          %s368 = sshll.u32 %s359, 4
          %s369 = int_to_ptr.vmem [resolvable:$true] %s368
          %s370 = sshll.u32 %s366, 4
          %s371 = int_to_ptr.hbm [resolvable:$true] %s370
          %373 = dma.vmem_to_hbm [thread:$0]  %s369, 128, %s371, %s356
        $region39: #{tpu_custom_call.1} parent=27 // pred_fallthru
          _
      $region28: #{tpu_custom_call.1} parent=5 // pred_fallthru
        _
      %p374 = scmp.le.s32.totalorder 2, %s11
      // Predicated region
      $region40: #{tpu_custom_call.1} parent=5 // pred_check
        %p375 = pneg %p374
      $region41: #{tpu_custom_call.1} parent=5 // pred_check_branch
        %377 = sbr.rel (%p375) target = $region43
      $region42: #{tpu_custom_call.1} parent=5 // pred_region
        %s378 = ssub.s32 %s11, 2
        // Predicated region
        $region44: #{tpu_custom_call.1} parent=42 // pred_check
          %p379 = pneg %p92
        $region45: #{tpu_custom_call.1} parent=42 // pred_check_branch
          %381 = sbr.rel (%p379) target = $region47
        $region46: #{tpu_custom_call.1} parent=42 // pred_region
          %s382 = sand.u32 %s77, 1
          %s383 = scalar_lea.sflag [#allocation3], %s382
          %s384 = sand.u32 %s77, 1
          %s385 = smul.addr %s384, 8
          %s386 = scalar_lea.vmem [#allocation2], %s385
          %388 = dma.done %s383, 128
        $region47: #{tpu_custom_call.1} parent=42 // pred_fallthru
          _
      $region43: #{tpu_custom_call.1} parent=5 // pred_fallthru
        _
    $region6: #{tpu_custom_call.1} parent=1 // loop_footer
      %s15 = sadd.s32 1, %s11
    $region7: #{tpu_custom_call.1} parent=1 // loop_footer_branch
      %10 = sbr.rel target = $region3
    $region8: #{tpu_custom_call.1} parent=1 // loop_exit
      _
    %389 = vsyncpa [#allocation3], 1
    %s390 = scalar_lea.sflag [#allocation3], 1
    %391 = vsyncpa %s390, 1

</llo_original>
